<compile_context>
chip_gen: v5e
topology: v5e:2x2
jax: 0.10.0
libtpu: 0.0.40
codegen_flags: <defaults>
</compile_context>

<pallas_src>
import functools

import jax
import jax.numpy as jnp
from jax.experimental import pallas as pl
from jax.experimental.pallas import tpu as pltpu

# Synthetic feature definitions (the original file's INPUT_FEATURES /
# OUTPUT_FEATURES are not given; pick small, consistent sizes).
NUM_INPUT_FEATURES = 16
NUM_OUTPUT_FEATURES = 8

H1, H2, H3 = 128, 64, 32        # logical hidden widths (match the PyTorch module)
LANE = 128                       # TPU lane width; hidden matmul dims padded to this
H2P, H3P, OUTP = LANE, LANE, LANE

MAX_BATCH_TILE = 4096            # ~18 MiB peak VMEM per step -> fits v7x's 32 MiB scoped default


def _mlp_kernel(x_ref,
                w1_ref, b1_ref,
                w2_ref, b2_ref,
                w3_ref, b3_ref,
                w4_ref, b4_ref,
                o_ref, *, use_bf16):
    # Whole forward pass fused per batch tile. All matmul lane dims are 128.
    cdt = jnp.bfloat16 if use_bf16 else jnp.float32

    x = jnp.log1p(x_ref[...] + 1e-6)

    h = jnp.dot(x.astype(cdt), w1_ref[...], preferred_element_type=jnp.float32)
    h = jnp.maximum(h + b1_ref[...], 0.0)          # relu + (eval) dropout = identity

    h = jnp.dot(h.astype(cdt), w2_ref[...], preferred_element_type=jnp.float32)
    h = jnp.maximum(h + b2_ref[...], 0.0)

    h = jnp.dot(h.astype(cdt), w3_ref[...], preferred_element_type=jnp.float32)
    h = jnp.maximum(h + b3_ref[...], 0.0)

    y = jnp.dot(h.astype(cdt), w4_ref[...], preferred_element_type=jnp.float32)
    y = y + b4_ref[...]

    # Narrow epilogue: exp + store only the 8 real output columns. The padded
    # 120 lanes of y never go through the EUP and never touch HBM.
    o_ref[...] = jnp.exp(y[:, :NUM_OUTPUT_FEATURES])


def _round_up(x, m):
    return ((x + m - 1) // m) * m


def _pad_to(a, shape):
    pads = [(0, s - d) for d, s in zip(a.shape, shape)]
    return jnp.pad(a, pads)


def _prepare_params(params, use_bf16):
    """Zero-pad matmul output dims to 128 lanes; cast weights to compute dtype."""
    w1, b1, w2, b2, w3, b3, w4, b4 = params
    wdt = jnp.bfloat16 if use_bf16 else jnp.float32
    return (
        w1.astype(wdt),                      b1,                        # (16,128), (1,128)
        _pad_to(w2, (H1, H2P)).astype(wdt),  _pad_to(b2, (1, H2P)),
        _pad_to(w3, (H2P, H3P)).astype(wdt), _pad_to(b3, (1, H3P)),
        _pad_to(w4, (H3P, OUTP)).astype(wdt), _pad_to(b4, (1, OUTP)),
    )


def _pick_batch_tile(B):
    """Large, 8-aligned tiles; >= 2 grid steps when possible (v7x megacore)."""
    b8 = _round_up(B, 8)
    if b8 <= 8:
        return 8
    half = _round_up(b8 // 2, 8)
    return min(MAX_BATCH_TILE, half)


def neural_network_forward(x, params, *, use_bf16=True, batch_tile=None):
    """x: (B, NUM_INPUT_FEATURES) float32. Returns (B, NUM_OUTPUT_FEATURES)."""
    B, F = x.shape
    assert F == NUM_INPUT_FEATURES

    if batch_tile is None:
        batch_tile = _pick_batch_tile(B)
    assert batch_tile % 8 == 0

    # Pad the batch (zero rows) to a multiple of the tile; padded rows are
    # computed (log1p(1e-6) is finite, everything downstream is inert) and
    # sliced off at the end.
    B_pad = _round_up(max(B, batch_tile), batch_tile)
    if B_pad != B:
        x = jnp.pad(x, ((0, B_pad - B), (0, 0)))

    prepared = _prepare_params(params, use_bf16)

    # Weights/biases use a constant index_map -> stay resident in VMEM.
    def resident(shape):
        return pl.BlockSpec(shape, lambda i: (0,) * len(shape))

    in_specs = [pl.BlockSpec((batch_tile, F), lambda i: (i, 0))]
    in_specs += [resident(p.shape) for p in prepared]

    grid = (B_pad // batch_tile,)

    flops = 2 * B_pad * (F * H1 + H1 * H2P + H2P * H3P + H3P * OUTP)
    transcendentals = B_pad * (F + NUM_OUTPUT_FEATURES)           # log1p + exp
    bytes_accessed = (B_pad * F * 4 + B_pad * NUM_OUTPUT_FEATURES * 4
                      + sum(int(p.size) * p.dtype.itemsize for p in prepared))

    out = pl.pallas_call(
        functools.partial(_mlp_kernel, use_bf16=use_bf16),
        out_shape=jax.ShapeDtypeStruct((B_pad, NUM_OUTPUT_FEATURES), jnp.float32),
        grid_spec=pltpu.PrefetchScalarGridSpec(
            num_scalar_prefetch=0,
            grid=grid,
            in_specs=in_specs,
            out_specs=pl.BlockSpec((batch_tile, NUM_OUTPUT_FEATURES),
                                   lambda i: (i, 0)),
        ),
        compiler_params=pltpu.CompilerParams(
            dimension_semantics=("parallel",)),
        cost_estimate=pl.CostEstimate(flops=int(flops),
                                      transcendentals=int(transcendentals),
                                      bytes_accessed=int(bytes_accessed)),
    )(x, *prepared)

    return out[:B] if B_pad != B else out


def init_params(key):
    """Deterministic parameter init. Weights stored as (in, out) (pre-transposed)."""
    dims = [(NUM_INPUT_FEATURES, H1), (H1, H2), (H2, H3), (H3, NUM_OUTPUT_FEATURES)]
    params = []
    for fan_in, fan_out in dims:
        kw, kb, key = jax.random.split(key, 3)
        bound = 1.0 / jnp.sqrt(fan_in)  # matches nn.Linear default init range
        w = jax.random.uniform(kw, (fan_in, fan_out), jnp.float32, -bound, bound)
        b = jax.random.uniform(kb, (1, fan_out), jnp.float32, -bound, bound)
        params += [w, b]
    return tuple(params)


def reference_forward(x, params):
    """Plain-JAX (f32) reference for correctness checking."""
    w1, b1, w2, b2, w3, b3, w4, b4 = params
    h = jnp.log1p(x + 1e-6)
    h = jax.nn.relu(h @ w1 + b1)
    h = jax.nn.relu(h @ w2 + b2)
    h = jax.nn.relu(h @ w3 + b3)
    return jnp.exp(h @ w4 + b4)


if __name__ == "__main__":
    key = jax.random.PRNGKey(0)
    kx, kx2, kx3, kp = jax.random.split(key, 4)
    params = init_params(kp)

    # 1) Small case, exact f32 path (single-step grid): tight tolerance.
    batch = 8
    x = jax.random.uniform(kx, (batch, NUM_INPUT_FEATURES), jnp.float32,
                           minval=0.0, maxval=2.0)
    out = jax.block_until_ready(neural_network_forward(x, params, use_bf16=False))
    ref = reference_forward(x, params)
    assert out.shape == (batch, NUM_OUTPUT_FEATURES)
    assert jnp.allclose(out, ref, rtol=1e-5, atol=1e-5), "mismatch vs reference (B=8, f32)"

    # 2) Non-aligned batch exercising the pad-to-tile / multi-step path (f32).
    batch2 = 100  # -> batch_tile=56, padded to 112, 2 grid steps
    x2 = jax.random.uniform(kx2, (batch2, NUM_INPUT_FEATURES), jnp.float32,
                            minval=0.0, maxval=2.0)
    out2 = jax.block_until_ready(neural_network_forward(x2, params, use_bf16=False))
    ref2 = reference_forward(x2, params)
    assert out2.shape == (batch2, NUM_OUTPUT_FEATURES)
    assert jnp.allclose(out2, ref2, rtol=1e-5, atol=1e-5), "mismatch vs reference (B=100, f32)"

    # 3) Larger case on the default bf16-matmul path (multi-step, megacore grid).
    batch3 = 2048  # -> batch_tile=1024, 2 grid steps
    x3 = jax.random.uniform(kx3, (batch3, NUM_INPUT_FEATURES), jnp.float32,
                            minval=0.0, maxval=2.0)
    out3 = jax.block_until_ready(neural_network_forward(x3, params, use_bf16=True))
    ref3 = reference_forward(x3, params)
    assert out3.shape == (batch3, NUM_OUTPUT_FEATURES)
    assert jnp.allclose(out3, ref3, rtol=5e-2, atol=5e-2), "mismatch vs reference (B=2048, bf16)"

    print("KERNEL_OK")
</pallas_src>

<mosaic_0001>
module attributes {stable_mosaic.version = 11 : i64} {
  func.func @_mlp_kernel(%arg0: i32, %arg1: memref<8x16xf32, #tpu.memory_space<vmem>>, %arg2: memref<16x128xf32, #tpu.memory_space<vmem>>, %arg3: memref<1x128xf32, #tpu.memory_space<vmem>>, %arg4: memref<128x128xf32, #tpu.memory_space<vmem>>, %arg5: memref<1x128xf32, #tpu.memory_space<vmem>>, %arg6: memref<128x128xf32, #tpu.memory_space<vmem>>, %arg7: memref<1x128xf32, #tpu.memory_space<vmem>>, %arg8: memref<128x128xf32, #tpu.memory_space<vmem>>, %arg9: memref<1x128xf32, #tpu.memory_space<vmem>>, %arg10: memref<8x8xf32, #tpu.memory_space<vmem>>) attributes {dimension_semantics = [#tpu.dimension_semantics<parallel>], iteration_bounds = array<i64: 1>, scalar_prefetch = 0 : i64, scratch_operands = 0 : i64, tpu.core_type = #tpu.core_type<tc>, window_params = [{transform_indices = @transform_0, window_bounds = array<i64: 8, 16>}, {pipeline_mode = #tpu.pipeline_mode<synchronous>, transform_indices = @transform_1, window_bounds = array<i64: 16, 128>}, {pipeline_mode = #tpu.pipeline_mode<synchronous>, transform_indices = @transform_2, window_bounds = array<i64: 1, 128>}, {pipeline_mode = #tpu.pipeline_mode<synchronous>, transform_indices = @transform_3, window_bounds = array<i64: 128, 128>}, {pipeline_mode = #tpu.pipeline_mode<synchronous>, transform_indices = @transform_4, window_bounds = array<i64: 1, 128>}, {pipeline_mode = #tpu.pipeline_mode<synchronous>, transform_indices = @transform_5, window_bounds = array<i64: 128, 128>}, {pipeline_mode = #tpu.pipeline_mode<synchronous>, transform_indices = @transform_6, window_bounds = array<i64: 1, 128>}, {pipeline_mode = #tpu.pipeline_mode<synchronous>, transform_indices = @transform_7, window_bounds = array<i64: 128, 128>}, {pipeline_mode = #tpu.pipeline_mode<synchronous>, transform_indices = @transform_8, window_bounds = array<i64: 1, 128>}, {transform_indices = @transform_9, window_bounds = array<i64: 8, 8>}]} {
    %c0 = arith.constant 0 : index
    %c0_0 = arith.constant 0 : index
    %0 = vector.load %arg1[%c0, %c0_0] : memref<8x16xf32, #tpu.memory_space<vmem>>, vector<8x16xf32>
    %cst = arith.constant 9.99999997E-7 : f32
    %1 = vector.broadcast %cst : f32 to vector<8x16xf32>
    %2 = arith.addf %0, %1 : vector<8x16xf32>
    %3 = math.log1p %2 : vector<8x16xf32>
    %c0_1 = arith.constant 0 : index
    %c0_2 = arith.constant 0 : index
    %4 = vector.load %arg2[%c0_1, %c0_2] : memref<16x128xf32, #tpu.memory_space<vmem>>, vector<16x128xf32>
    %cst_3 = arith.constant dense<0.000000e+00> : vector<8x128xf32>
    %5 = tpu.matmul %3, %4, %cst_3 {dimension_numbers = #tpu.dot_dimension_numbers<[1], [0], [0], [1], [0, 0, 1, 1], [], []>} : vector<8x16xf32>, vector<16x128xf32>, vector<8x128xf32> -> vector<8x128xf32>
    %c0_4 = arith.constant 0 : index
    %c0_5 = arith.constant 0 : index
    %6 = vector.load %arg3[%c0_4, %c0_5] : memref<1x128xf32, #tpu.memory_space<vmem>>, vector<1x128xf32>
    %7 = vector.broadcast %6 : vector<1x128xf32> to vector<8x128xf32>
    %8 = arith.addf %5, %7 : vector<8x128xf32>
    %cst_6 = arith.constant 0.000000e+00 : f32
    %9 = vector.broadcast %cst_6 : f32 to vector<8x128xf32>
    %10 = arith.maximumf %8, %9 : vector<8x128xf32>
    %c0_7 = arith.constant 0 : index
    %c0_8 = arith.constant 0 : index
    %11 = vector.load %arg4[%c0_7, %c0_8] : memref<128x128xf32, #tpu.memory_space<vmem>>, vector<128x128xf32>
    %cst_9 = arith.constant dense<0.000000e+00> : vector<8x128xf32>
    %12 = tpu.matmul %10, %11, %cst_9 {dimension_numbers = #tpu.dot_dimension_numbers<[1], [0], [0], [1], [0, 0, 1, 1], [], []>} : vector<8x128xf32>, vector<128x128xf32>, vector<8x128xf32> -> vector<8x128xf32>
    %c0_10 = arith.constant 0 : index
    %c0_11 = arith.constant 0 : index
    %13 = vector.load %arg5[%c0_10, %c0_11] : memref<1x128xf32, #tpu.memory_space<vmem>>, vector<1x128xf32>
    %14 = vector.broadcast %13 : vector<1x128xf32> to vector<8x128xf32>
    %15 = arith.addf %12, %14 : vector<8x128xf32>
    %cst_12 = arith.constant 0.000000e+00 : f32
    %16 = vector.broadcast %cst_12 : f32 to vector<8x128xf32>
    %17 = arith.maximumf %15, %16 : vector<8x128xf32>
    %c0_13 = arith.constant 0 : index
    %c0_14 = arith.constant 0 : index
    %18 = vector.load %arg6[%c0_13, %c0_14] : memref<128x128xf32, #tpu.memory_space<vmem>>, vector<128x128xf32>
    %cst_15 = arith.constant dense<0.000000e+00> : vector<8x128xf32>
    %19 = tpu.matmul %17, %18, %cst_15 {dimension_numbers = #tpu.dot_dimension_numbers<[1], [0], [0], [1], [0, 0, 1, 1], [], []>} : vector<8x128xf32>, vector<128x128xf32>, vector<8x128xf32> -> vector<8x128xf32>
    %c0_16 = arith.constant 0 : index
    %c0_17 = arith.constant 0 : index
    %20 = vector.load %arg7[%c0_16, %c0_17] : memref<1x128xf32, #tpu.memory_space<vmem>>, vector<1x128xf32>
    %21 = vector.broadcast %20 : vector<1x128xf32> to vector<8x128xf32>
    %22 = arith.addf %19, %21 : vector<8x128xf32>
    %cst_18 = arith.constant 0.000000e+00 : f32
    %23 = vector.broadcast %cst_18 : f32 to vector<8x128xf32>
    %24 = arith.maximumf %22, %23 : vector<8x128xf32>
    %c0_19 = arith.constant 0 : index
    %c0_20 = arith.constant 0 : index
    %25 = vector.load %arg8[%c0_19, %c0_20] : memref<128x128xf32, #tpu.memory_space<vmem>>, vector<128x128xf32>
    %cst_21 = arith.constant dense<0.000000e+00> : vector<8x128xf32>
    %26 = tpu.matmul %24, %25, %cst_21 {dimension_numbers = #tpu.dot_dimension_numbers<[1], [0], [0], [1], [0, 0, 1, 1], [], []>} : vector<8x128xf32>, vector<128x128xf32>, vector<8x128xf32> -> vector<8x128xf32>
    %c0_22 = arith.constant 0 : index
    %c0_23 = arith.constant 0 : index
    %27 = vector.load %arg9[%c0_22, %c0_23] : memref<1x128xf32, #tpu.memory_space<vmem>>, vector<1x128xf32>
    %28 = vector.broadcast %27 : vector<1x128xf32> to vector<8x128xf32>
    %29 = arith.addf %26, %28 : vector<8x128xf32>
    %30 = vector.extract_strided_slice %29 {offsets = [0, 0], sizes = [8, 8], strides = [1, 1]} : vector<8x128xf32> to vector<8x8xf32>
    %31 = math.exp %30 : vector<8x8xf32>
    %c0_24 = arith.constant 0 : index
    %c0_25 = arith.constant 0 : index
    %32 = vector.load %arg10[%c0_24, %c0_25] : memref<8x8xf32, #tpu.memory_space<vmem>>, vector<8x8xf32>
    tpu.vector_store %arg10[%c0_24, %c0_25], %31 {strides = array<i32>} : memref<8x8xf32, #tpu.memory_space<vmem>>, vector<8x8xf32>,
    return
  }
  func.func @transform_0(%arg0: i32) -> (i32, i32) {
    %c0_i32 = arith.constant 0 : i32
    %c0_i32_0 = arith.constant 0 : i32
    return %arg0, %c0_i32 : i32, i32
  }
  func.func @transform_1(%arg0: i32) -> (i32, i32) {
    %c0_i32 = arith.constant 0 : i32
    %c0_i32_0 = arith.constant 0 : i32
    %c0_i32_1 = arith.constant 0 : i32
    return %c0_i32, %c0_i32_0 : i32, i32
  }
  func.func @transform_2(%arg0: i32) -> (i32, i32) {
    %c0_i32 = arith.constant 0 : i32
    %c0_i32_0 = arith.constant 0 : i32
    %c0_i32_1 = arith.constant 0 : i32
    return %c0_i32, %c0_i32_0 : i32, i32
  }
  func.func @transform_3(%arg0: i32) -> (i32, i32) {
    %c0_i32 = arith.constant 0 : i32
    %c0_i32_0 = arith.constant 0 : i32
    %c0_i32_1 = arith.constant 0 : i32
    return %c0_i32, %c0_i32_0 : i32, i32
  }
  func.func @transform_4(%arg0: i32) -> (i32, i32) {
    %c0_i32 = arith.constant 0 : i32
    %c0_i32_0 = arith.constant 0 : i32
    %c0_i32_1 = arith.constant 0 : i32
    return %c0_i32, %c0_i32_0 : i32, i32
  }
  func.func @transform_5(%arg0: i32) -> (i32, i32) {
    %c0_i32 = arith.constant 0 : i32
    %c0_i32_0 = arith.constant 0 : i32
    %c0_i32_1 = arith.constant 0 : i32
    return %c0_i32, %c0_i32_0 : i32, i32
  }
  func.func @transform_6(%arg0: i32) -> (i32, i32) {
    %c0_i32 = arith.constant 0 : i32
    %c0_i32_0 = arith.constant 0 : i32
    %c0_i32_1 = arith.constant 0 : i32
    return %c0_i32, %c0_i32_0 : i32, i32
  }
  func.func @transform_7(%arg0: i32) -> (i32, i32) {
    %c0_i32 = arith.constant 0 : i32
    %c0_i32_0 = arith.constant 0 : i32
    %c0_i32_1 = arith.constant 0 : i32
    return %c0_i32, %c0_i32_0 : i32, i32
  }
  func.func @transform_8(%arg0: i32) -> (i32, i32) {
    %c0_i32 = arith.constant 0 : i32
    %c0_i32_0 = arith.constant 0 : i32
    %c0_i32_1 = arith.constant 0 : i32
    return %c0_i32, %c0_i32_0 : i32, i32
  }
  func.func @transform_9(%arg0: i32) -> (i32, i32) {
    %c0_i32 = arith.constant 0 : i32
    %c0_i32_0 = arith.constant 0 : i32
    return %arg0, %c0_i32 : i32, i32
  }
}

</mosaic_0001>

<llo_original>
// kernel: tpu_custom_call.1
$region0: #{tpu_custom_call.1}
  #allocation0 [shape = 'u32[]', space=smem, size = 0x4, offset = 0x4, fixed_abs, tag = 'smem constant byte address 0x4 - core index']
  #allocation1 [shape = 'u32[72,128]{1,0:T(1,128)}', space=vmem, size = 0x9000, scoped, tag = 'internal scratch']
  %s0 = inlined_call_operand.hbm [shape: f32[8,16], index: 0, kind: input, shape index: {}]
  %s1 = inlined_call_operand.hbm [shape: f32[16,128], index: 1, kind: input, shape index: {}]
  %s2 = inlined_call_operand.vmem [shape: f32[1,128], index: 2, kind: input, shape index: {}]
  %s3 = inlined_call_operand.hbm [shape: f32[128,128], index: 3, kind: input, shape index: {}]
  %s4 = inlined_call_operand.vmem [shape: f32[1,128], index: 4, kind: input, shape index: {}]
  %s5 = inlined_call_operand.hbm [shape: f32[128,128], index: 5, kind: input, shape index: {}]
  %s6 = inlined_call_operand.vmem [shape: f32[1,128], index: 6, kind: input, shape index: {}]
  %s7 = inlined_call_operand.hbm [shape: f32[128,128], index: 7, kind: input, shape index: {}]
  %s8 = inlined_call_operand.vmem [shape: f32[1,128], index: 8, kind: input, shape index: {}]
  %s9 = inlined_call_operand.hbm [shape: f32[8,8], index: 9, kind: output, shape index: {}]
  %s10 = sld [smem:[#allocation0]]
  $region66: #{tpu_custom_call.1} parent=0
    _
  %s12 = ssub.s32 1, %s10
  %s13 = scalar_select 0, %s12, %s10
  $region1: #{tpu_custom_call.1} parent=0
    #allocation2 [shape = 'u8[4096]{0}', space=vmem, size = 0x1000, scoped, tag = 'input window, operand 0, single buffered']
    #allocation3 [shape = 's32[1]{0}', space=sflag, size = 0x4, scoped, tag = 'scoped memory for tpu_custom_call.1']
    #allocation4 [shape = 's32[1]{0}', space=sflag, size = 0x4, scoped, tag = 'scoped memory for tpu_custom_call.1']
    #allocation5 [shape = 'u8[8192]{0}', space=vmem, size = 0x2000, scoped, tag = 'input window, operand 1, single buffered']
    #allocation6 [shape = 's32[1]{0}', space=sflag, size = 0x4, scoped, tag = 'scoped memory for tpu_custom_call.1']
    #allocation7 [shape = 'u8[65536]{0}', space=vmem, size = 0x10000, scoped, tag = 'input window, operand 3, single buffered']
    #allocation8 [shape = 'u8[65536]{0}', space=vmem, size = 0x10000, scoped, tag = 'input window, operand 5, single buffered']
    #allocation9 [shape = 's32[1]{0}', space=sflag, size = 0x4, scoped, tag = 'scoped memory for tpu_custom_call.1']
    #allocation10 [shape = 'u8[65536]{0}', space=vmem, size = 0x10000, scoped, tag = 'input window, operand 7, single buffered']
    #allocation11 [shape = 'u8[4096]{0}', space=vmem, size = 0x1000, scoped, tag = 'output window, operand 0, single buffered']
    %14 = vsyncpa [#allocation3], 0
    %15 = vsyncpa [#allocation6], 0
    %16 = vsyncpa [#allocation9], 0
    %17 = vsyncpa [#allocation4], 0
    // Predicated region
    $region2: #{tpu_custom_call.1} parent=1 // pred_check
      _
    $region3: #{tpu_custom_call.1} parent=1 // pred_check_branch
      %19 = sbr.rel (0) target = $region5
    $region4: #{tpu_custom_call.1} parent=1 // pred_region
      %21 = vsyncadd [#allocation3], 0
      %s23 = sshll.u32 %s0, 4
      %s24 = int_to_ptr.hbm [resolvable:$true] %s23
      %s25 = sshll.u32 [#allocation2], 4
      %s26 = int_to_ptr.vmem [resolvable:$true] %s25
      %28 = dma.hbm_to_vmem [thread:$0]  %s24, 128, %s26, [#allocation3]
    $region5: #{tpu_custom_call.1} parent=1 // pred_fallthru
      _
    // Predicated region
    $region6: #{tpu_custom_call.1} parent=1 // pred_check
      _
    $region7: #{tpu_custom_call.1} parent=1 // pred_check_branch
      %30 = sbr.rel (0) target = $region9
    $region8: #{tpu_custom_call.1} parent=1 // pred_region
      %32 = vsyncadd [#allocation6], 0
      %s33 = sshll.u32 %s1, 4
      %s34 = int_to_ptr.hbm [resolvable:$true] %s33
      %s35 = sshll.u32 [#allocation5], 4
      %s36 = int_to_ptr.vmem [resolvable:$true] %s35
      %41 = dma.hbm_to_vmem [thread:$0]  %s34, 256, %s36, [#allocation6], 128, 128, 8
    $region9: #{tpu_custom_call.1} parent=1 // pred_fallthru
      _
    // Predicated region
    $region10: #{tpu_custom_call.1} parent=1 // pred_check
      _
    $region11: #{tpu_custom_call.1} parent=1 // pred_check_branch
      %43 = sbr.rel (0) target = $region13
    $region12: #{tpu_custom_call.1} parent=1 // pred_region
      _
    $region13: #{tpu_custom_call.1} parent=1 // pred_fallthru
      _
    // Predicated region
    $region14: #{tpu_custom_call.1} parent=1 // pred_check
      _
    $region15: #{tpu_custom_call.1} parent=1 // pred_check_branch
      %45 = sbr.rel (0) target = $region17
    $region16: #{tpu_custom_call.1} parent=1 // pred_region
      %47 = vsyncadd [#allocation6], 0
      %s48 = sshll.u32 %s3, 4
      %s49 = int_to_ptr.hbm [resolvable:$true] %s48
      %s50 = sshll.u32 [#allocation7], 4
      %s51 = int_to_ptr.vmem [resolvable:$true] %s50
      %56 = dma.hbm_to_vmem [thread:$0]  %s49, 2048, %s51, [#allocation6], 128, 128, 8
    $region17: #{tpu_custom_call.1} parent=1 // pred_fallthru
      _
    // Predicated region
    $region18: #{tpu_custom_call.1} parent=1 // pred_check
      _
    $region19: #{tpu_custom_call.1} parent=1 // pred_check_branch
      %58 = sbr.rel (0) target = $region21
    $region20: #{tpu_custom_call.1} parent=1 // pred_region
      _
    $region21: #{tpu_custom_call.1} parent=1 // pred_fallthru
      _
    // Predicated region
    $region22: #{tpu_custom_call.1} parent=1 // pred_check
      _
    $region23: #{tpu_custom_call.1} parent=1 // pred_check_branch
      %60 = sbr.rel (0) target = $region25
    $region24: #{tpu_custom_call.1} parent=1 // pred_region
      %62 = vsyncadd [#allocation9], 0
      %s63 = sshll.u32 %s5, 4
      %s64 = int_to_ptr.hbm [resolvable:$true] %s63
      %s65 = sshll.u32 [#allocation8], 4
      %s66 = int_to_ptr.vmem [resolvable:$true] %s65
      %71 = dma.hbm_to_vmem [thread:$0]  %s64, 2048, %s66, [#allocation9], 128, 128, 8
    $region25: #{tpu_custom_call.1} parent=1 // pred_fallthru
      _
    // Predicated region
    $region26: #{tpu_custom_call.1} parent=1 // pred_check
      _
    $region27: #{tpu_custom_call.1} parent=1 // pred_check_branch
      %73 = sbr.rel (0) target = $region29
    $region28: #{tpu_custom_call.1} parent=1 // pred_region
      _
    $region29: #{tpu_custom_call.1} parent=1 // pred_fallthru
      _
    // Predicated region
    $region30: #{tpu_custom_call.1} parent=1 // pred_check
      _
    $region31: #{tpu_custom_call.1} parent=1 // pred_check_branch
      %75 = sbr.rel (0) target = $region33
    $region32: #{tpu_custom_call.1} parent=1 // pred_region
      %77 = vsyncadd [#allocation9], 0
      %s78 = sshll.u32 %s7, 4
      %s79 = int_to_ptr.hbm [resolvable:$true] %s78
      %s80 = sshll.u32 [#allocation10], 4
      %s81 = int_to_ptr.vmem [resolvable:$true] %s80
      %86 = dma.hbm_to_vmem [thread:$0]  %s79, 2048, %s81, [#allocation9], 128, 128, 8
    $region33: #{tpu_custom_call.1} parent=1 // pred_fallthru
      _
    // Predicated region
    $region34: #{tpu_custom_call.1} parent=1 // pred_check
      _
    $region35: #{tpu_custom_call.1} parent=1 // pred_check_branch
      %88 = sbr.rel (0) target = $region37
    $region36: #{tpu_custom_call.1} parent=1 // pred_region
      _
    $region37: #{tpu_custom_call.1} parent=1 // pred_fallthru
      _
    // Predicated region
    $region38: #{tpu_custom_call.1} parent=1 // pred_check
      _
    $region39: #{tpu_custom_call.1} parent=1 // pred_check_branch
      %90 = sbr.rel (0) target = $region41
    $region40: #{tpu_custom_call.1} parent=1 // pred_region
      %92 = dma.done [#allocation3], 128
    $region41: #{tpu_custom_call.1} parent=1 // pred_fallthru
      _
    // Predicated region
    $region42: #{tpu_custom_call.1} parent=1 // pred_check
      _
    $region43: #{tpu_custom_call.1} parent=1 // pred_check_branch
      %94 = sbr.rel (0) target = $region45
    $region44: #{tpu_custom_call.1} parent=1 // pred_region
      %96 = dma.done [#allocation6], 256
    $region45: #{tpu_custom_call.1} parent=1 // pred_fallthru
      _
    // Predicated region
    $region46: #{tpu_custom_call.1} parent=1 // pred_check
      _
    $region47: #{tpu_custom_call.1} parent=1 // pred_check_branch
      %98 = sbr.rel (0) target = $region49
    $region48: #{tpu_custom_call.1} parent=1 // pred_region
      %100 = dma.done [#allocation6], 2048
    $region49: #{tpu_custom_call.1} parent=1 // pred_fallthru
      _
    // Predicated region
    $region50: #{tpu_custom_call.1} parent=1 // pred_check
      _
    $region51: #{tpu_custom_call.1} parent=1 // pred_check_branch
      %102 = sbr.rel (0) target = $region53
    $region52: #{tpu_custom_call.1} parent=1 // pred_region
      %104 = dma.done [#allocation9], 2048
    $region53: #{tpu_custom_call.1} parent=1 // pred_fallthru
      _
    // Predicated region
    $region54: #{tpu_custom_call.1} parent=1 // pred_check
      _
    $region55: #{tpu_custom_call.1} parent=1 // pred_check_branch
      %106 = sbr.rel (0) target = $region57
    $region56: #{tpu_custom_call.1} parent=1 // pred_region
      %108 = dma.done [#allocation9], 2048
    $region57: #{tpu_custom_call.1} parent=1 // pred_fallthru
      _
    %v109 = vld [vmem:[#allocation2] sm:$0xff]
    %v110 = vadd.f32 %v109, 1e-06
    %v111 = vadd.f32 %v110, 1.0
    %v112 = vlog2.pop %v111
    %v113 = vmul.f32 %v112, 0.6931472
    %v114 = vmul.f32 -0.5, %v110
    %v115 = vadd.f32 %v114, 1.0
    %v116 = vmul.f32 %v115, %v110
    %v117 = vand.u32 2147483647, %v110
    %vm118 = vcmp.lt.f32.partialorder %v117, 0.0004427343
    %v119 = vsel %vm118, %v116, %v113
    %v120 = vld [vmem:[#allocation5] sm:$0xff]
    %v121 = vld [vmem:[#allocation5 + $0x8] sm:$0xff]
    %v122 = vld [vmem:[%s2] sm:$0x1]
    %v124 = vperm.slane %v122, 0
    %vm126 = vcmask 130048
    %v128 = vsel %vm126, %v119, 0
    %130 = vmatpush.msra.mxu0 0.0
    %131 = vmatpush.msra.mxu0 0.0
    %132 = vmatpush.msra.mxu0 0.0
    %133 = vmatpush.msra.mxu0 0.0
    %134 = vmatpush.msra.mxu0 0.0
    %135 = vmatpush.msra.mxu0 0.0
    %136 = vmatpush.msra.mxu0 0.0
    %137 = vmatpush.msra.mxu0 0.0
    %138 = vmatpush.msra.mxu0 0.0
    %139 = vmatpush.msra.mxu0 0.0
    %140 = vmatpush.msra.mxu0 0.0
    %141 = vmatpush.msra.mxu0 0.0
    %142 = vmatpush.msra.mxu0 0.0
    %143 = vmatpush.msra.mxu0 0.0
    %144 = vmatpush.msra.mxu0 %v121
    %145 = vmatpush.msra.mxu0 %v120
    %146 = vmatmul.f32.gmra.mxu0 %v128
    %v147 = vpop.f32.mrf.mxu0
    %v148 = vadd.f32 %v124, %v147
    %149 = vdwg.mxu0
    %v150 = vmax.f32 %v148, 0.0
    %v151 = vld [vmem:[#allocation7] sm:$0xff]
    %v152 = vld [vmem:[#allocation7 + $0x8] sm:$0xff]
    %v153 = vld [vmem:[#allocation7 + $0x10] sm:$0xff]
    %v154 = vld [vmem:[#allocation7 + $0x18] sm:$0xff]
    %v155 = vld [vmem:[#allocation7 + $0x20] sm:$0xff]
    %v156 = vld [vmem:[#allocation7 + $0x28] sm:$0xff]
    %v157 = vld [vmem:[#allocation7 + $0x30] sm:$0xff]
    %v158 = vld [vmem:[#allocation7 + $0x38] sm:$0xff]
    %v159 = vld [vmem:[#allocation7 + $0x40] sm:$0xff]
    %v160 = vld [vmem:[#allocation7 + $0x48] sm:$0xff]
    %v161 = vld [vmem:[#allocation7 + $0x50] sm:$0xff]
    %v162 = vld [vmem:[#allocation7 + $0x58] sm:$0xff]
    %v163 = vld [vmem:[#allocation7 + $0x60] sm:$0xff]
    %v164 = vld [vmem:[#allocation7 + $0x68] sm:$0xff]
    %v165 = vld [vmem:[#allocation7 + $0x70] sm:$0xff]
    %v166 = vld [vmem:[#allocation7 + $0x78] sm:$0xff]
    %v167 = vld [vmem:[%s4] sm:$0x1]
    %v169 = vperm.slane %v167, 0
    %171 = vmatpush.msra.mxu0 %v166
    %172 = vmatpush.msra.mxu0 %v165
    %173 = vmatpush.msra.mxu0 %v164
    %174 = vmatpush.msra.mxu0 %v163
    %175 = vmatpush.msra.mxu0 %v162
    %176 = vmatpush.msra.mxu0 %v161
    %177 = vmatpush.msra.mxu0 %v160
    %178 = vmatpush.msra.mxu0 %v159
    %179 = vmatpush.msra.mxu0 %v158
    %180 = vmatpush.msra.mxu0 %v157
    %181 = vmatpush.msra.mxu0 %v156
    %182 = vmatpush.msra.mxu0 %v155
    %183 = vmatpush.msra.mxu0 %v154
    %184 = vmatpush.msra.mxu0 %v153
    %185 = vmatpush.msra.mxu0 %v152
    %186 = vmatpush.msra.mxu0 %v151
    %187 = vmatmul.f32.gmra.mxu0 %v150
    %v188 = vpop.f32.mrf.mxu0
    %v189 = vadd.f32 %v169, %v188
    %190 = vdwg.mxu0
    %v191 = vmax.f32 %v189, 0.0
    %v192 = vld [vmem:[#allocation8] sm:$0xff]
    %v193 = vld [vmem:[#allocation8 + $0x8] sm:$0xff]
    %v194 = vld [vmem:[#allocation8 + $0x10] sm:$0xff]
    %v195 = vld [vmem:[#allocation8 + $0x18] sm:$0xff]
    %v196 = vld [vmem:[#allocation8 + $0x20] sm:$0xff]
    %v197 = vld [vmem:[#allocation8 + $0x28] sm:$0xff]
    %v198 = vld [vmem:[#allocation8 + $0x30] sm:$0xff]
    %v199 = vld [vmem:[#allocation8 + $0x38] sm:$0xff]
    %v200 = vld [vmem:[#allocation8 + $0x40] sm:$0xff]
    %v201 = vld [vmem:[#allocation8 + $0x48] sm:$0xff]
    %v202 = vld [vmem:[#allocation8 + $0x50] sm:$0xff]
    %v203 = vld [vmem:[#allocation8 + $0x58] sm:$0xff]
    %v204 = vld [vmem:[#allocation8 + $0x60] sm:$0xff]
    %v205 = vld [vmem:[#allocation8 + $0x68] sm:$0xff]
    %v206 = vld [vmem:[#allocation8 + $0x70] sm:$0xff]
    %v207 = vld [vmem:[#allocation8 + $0x78] sm:$0xff]
    %v208 = vld [vmem:[%s6] sm:$0x1]
    %v210 = vperm.slane %v208, 0
    %212 = vmatpush.msra.mxu0 %v207
    %213 = vmatpush.msra.mxu0 %v206
    %214 = vmatpush.msra.mxu0 %v205
    %215 = vmatpush.msra.mxu0 %v204
    %216 = vmatpush.msra.mxu0 %v203
    %217 = vmatpush.msra.mxu0 %v202
    %218 = vmatpush.msra.mxu0 %v201
    %219 = vmatpush.msra.mxu0 %v200
    %220 = vmatpush.msra.mxu0 %v199
    %221 = vmatpush.msra.mxu0 %v198
    %222 = vmatpush.msra.mxu0 %v197
    %223 = vmatpush.msra.mxu0 %v196
    %224 = vmatpush.msra.mxu0 %v195
    %225 = vmatpush.msra.mxu0 %v194
    %226 = vmatpush.msra.mxu0 %v193
    %227 = vmatpush.msra.mxu0 %v192
    %228 = vmatmul.f32.gmra.mxu0 %v191
    %v229 = vpop.f32.mrf.mxu0
    %v230 = vadd.f32 %v210, %v229
    %231 = vdwg.mxu0
    %v232 = vmax.f32 %v230, 0.0
    %v233 = vld [vmem:[#allocation10] sm:$0xff]
    %v234 = vld [vmem:[#allocation10 + $0x8] sm:$0xff]
    %v235 = vld [vmem:[#allocation10 + $0x10] sm:$0xff]
    %v236 = vld [vmem:[#allocation10 + $0x18] sm:$0xff]
    %v237 = vld [vmem:[#allocation10 + $0x20] sm:$0xff]
    %v238 = vld [vmem:[#allocation10 + $0x28] sm:$0xff]
    %v239 = vld [vmem:[#allocation10 + $0x30] sm:$0xff]
    %v240 = vld [vmem:[#allocation10 + $0x38] sm:$0xff]
    %v241 = vld [vmem:[#allocation10 + $0x40] sm:$0xff]
    %v242 = vld [vmem:[#allocation10 + $0x48] sm:$0xff]
    %v243 = vld [vmem:[#allocation10 + $0x50] sm:$0xff]
    %v244 = vld [vmem:[#allocation10 + $0x58] sm:$0xff]
    %v245 = vld [vmem:[#allocation10 + $0x60] sm:$0xff]
    %v246 = vld [vmem:[#allocation10 + $0x68] sm:$0xff]
    %v247 = vld [vmem:[#allocation10 + $0x70] sm:$0xff]
    %v248 = vld [vmem:[#allocation10 + $0x78] sm:$0xff]
    %v249 = vld [vmem:[%s8] sm:$0x1]
    %v251 = vperm.slane %v249, 0
    %253 = vmatpush.msra.mxu0 %v248
    %254 = vmatpush.msra.mxu0 %v247
    %255 = vmatpush.msra.mxu0 %v246
    %256 = vmatpush.msra.mxu0 %v245
    %257 = vmatpush.msra.mxu0 %v244
    %258 = vmatpush.msra.mxu0 %v243
    %259 = vmatpush.msra.mxu0 %v242
    %260 = vmatpush.msra.mxu0 %v241
    %261 = vmatpush.msra.mxu0 %v240
    %262 = vmatpush.msra.mxu0 %v239
    %263 = vmatpush.msra.mxu0 %v238
    %264 = vmatpush.msra.mxu0 %v237
    %265 = vmatpush.msra.mxu0 %v236
    %266 = vmatpush.msra.mxu0 %v235
    %267 = vmatpush.msra.mxu0 %v234
    %268 = vmatpush.msra.mxu0 %v233
    %269 = vmatmul.f32.gmra.mxu0 %v232
    %v270 = vpop.f32.mrf.mxu0
    %v271 = vadd.f32 %v251, %v270
    %272 = vdwg.mxu0
    %v273 = vmul.f32 %v271, 1.442695
    %v274 = vpow.pop %v273
    %vm275 = vcmask 64512
    %276 = vst.msk [vmem:[#allocation11] sm:$0xff] %vm275, %v274
    // Predicated region
    $region58: #{tpu_custom_call.1} parent=1 // pred_check
      _
    $region59: #{tpu_custom_call.1} parent=1 // pred_check_branch
      %278 = sbr.rel (0) target = $region61
    $region60: #{tpu_custom_call.1} parent=1 // pred_region
      %280 = vsyncadd [#allocation4], 0
      %s282 = sshll.u32 [#allocation11], 4
      %s283 = int_to_ptr.vmem [resolvable:$true] %s282
      %s284 = sshll.u32 %s9, 4
      %s285 = int_to_ptr.hbm [resolvable:$true] %s284
      %287 = dma.vmem_to_hbm [thread:$0]  %s283, 128, %s285, [#allocation4]
    $region61: #{tpu_custom_call.1} parent=1 // pred_fallthru
      _
    // Predicated region
    $region62: #{tpu_custom_call.1} parent=1 // pred_check
      _
    $region63: #{tpu_custom_call.1} parent=1 // pred_check_branch
      %289 = sbr.rel (0) target = $region65
    $region64: #{tpu_custom_call.1} parent=1 // pred_region
      %291 = dma.done [#allocation4], 128
    $region65: #{tpu_custom_call.1} parent=1 // pred_fallthru
      _
    %292 = vsyncpa [#allocation3], 1
    %293 = vsyncpa [#allocation6], 1
    %294 = vsyncpa [#allocation9], 1
    %295 = vsyncpa [#allocation4], 1

</llo_original>
